<compile_context>
chip_gen: v7x
topology: tpu7x:2x2x1
jax: 0.10.0
libtpu: 0.0.40
codegen_flags: <defaults>
</compile_context>

<pallas_src>
import functools

import jax
import jax.numpy as jnp
from jax.experimental import pallas as pl
from jax.experimental.pallas import tpu as pltpu


def _round_up(n, m):
    return ((n + m - 1) // m) * m


_LAYER_RELU = (True, True, True, True, True, False)


def mlp_kernel(x_ref,
               w1, b1, w2, b2, w3, b3, w4, b4, w5, b5, w6, b6,
               o_ref):
    """One batch tile of the 6-layer MLP.

    x_ref is f32 (cast to bf16 in-kernel), w* bf16, b* f32, o_ref f32.
    """
    layers = ((w1, b1), (w2, b2), (w3, b3), (w4, b4), (w5, b5), (w6, b6))

    def chain(h_f32):
        h = h_f32.astype(jnp.bfloat16)            # in-kernel pack, hidden under MXU
        for (w_ref, b_ref), relu in zip(layers, _LAYER_RELU):
            # bf16 x bf16 -> f32 accumulation on the MXU.
            y = jnp.dot(h, w_ref[...], preferred_element_type=jnp.float32)
            y = y + b_ref[...]                    # (tb, out) + (1, out) in f32
            if relu:
                h = jnp.maximum(y, 0.0).astype(jnp.bfloat16)
            else:
                h = y                             # final layer stays f32
        return h

    tb = x_ref.shape[0]
    if tb % 16 == 0 and tb >= 128:
        # Two independent half-tile streams -> scheduler can interleave their
        # matmuls and hide each layer's drain/epilogue latency.
        half = tb // 2                            # multiple of 8 -> aligned slices
        o_ref[0:half, :] = chain(x_ref[0:half, :]).astype(o_ref.dtype)
        o_ref[half:tb, :] = chain(x_ref[half:tb, :]).astype(o_ref.dtype)
    else:
        o_ref[...] = chain(x_ref[...]).astype(o_ref.dtype)


@functools.partial(jax.jit, static_argnames=("block_b",))
def simple_linear_regression_nn(x, params, *, block_b=2048):
    """x: [B, input_size] f32. params: list of (w [in,out] f32, b [1,out] f32)."""
    B, F = x.shape
    out_dim = params[-1][1].shape[-1]

    # Weights cast to bf16 once (tiny, ~10 KiB total); biases stay f32.
    flat, param_specs = [], []
    for w, b in params:
        flat.append(w.astype(jnp.bfloat16))
        flat.append(b.astype(jnp.float32))
        # Whole-array, grid-invariant blocks -> params stay VMEM-resident.
        param_specs.append(pl.BlockSpec(w.shape, lambda i: (0, 0)))
        param_specs.append(pl.BlockSpec(b.shape, lambda i: (0, 0)))

    # Batch tile: multiple of 8 sublanes; no padding — Pallas masks the
    # partial last block (cdiv grid, out_shape exactly (B, out_dim)).
    tb = min(block_b, _round_up(B, 8))
    grid = (pl.cdiv(B, tb),)

    x_spec = pl.BlockSpec((tb, F), lambda i: (i, 0))
    out_spec = pl.BlockSpec((tb, out_dim), lambda i: (i, 0))

    flops = 2 * B * sum(w.shape[0] * w.shape[1] for w, _ in params)
    bytes_accessed = (x.size * 4 + B * out_dim * 4
                      + sum(w.size * 2 + b.size * 4 for w, b in params))
    cost = pl.CostEstimate(flops=flops, transcendentals=0,
                           bytes_accessed=bytes_accessed)

    return pl.pallas_call(
        mlp_kernel,
        out_shape=jax.ShapeDtypeStruct((B, out_dim), jnp.float32),
        grid=grid,
        in_specs=[x_spec] + param_specs,
        out_specs=out_spec,
        compiler_params=pltpu.CompilerParams(
            dimension_semantics=("parallel",),
        ),
        cost_estimate=cost,
    )(x, *flat)


def init_params(input_size, key):
    """nn.Linear-style init; weights stored [in, out], biases [1, out]."""
    dims = [input_size, 64, 32, 16, 8, 4, 2]
    params = []
    for i in range(len(dims) - 1):
        fan_in, fan_out = dims[i], dims[i + 1]
        key, kw, kb = jax.random.split(key, 3)
        bound = 1.0 / jnp.sqrt(jnp.float32(fan_in))
        w = jax.random.uniform(kw, (fan_in, fan_out), jnp.float32, -bound, bound)
        b = jax.random.uniform(kb, (1, fan_out), jnp.float32, -bound, bound)
        params.append((w, b))
    return params


def reference_forward(x, params, matmul_dtype=jnp.float32):
    """Pure-JAX reference; matmul_dtype=bf16 mimics the kernel's operand cast."""
    h = x
    n = len(params)
    for i, (w, b) in enumerate(params):
        h = jnp.dot(h.astype(matmul_dtype), w.astype(matmul_dtype),
                    preferred_element_type=jnp.float32) + b
        if i < n - 1:
            h = jnp.maximum(h, 0.0)
    return h


if __name__ == "__main__":
    key = jax.random.PRNGKey(0)
    key, kx = jax.random.split(key)

    batch, input_size = 8, 32
    x = jax.random.normal(kx, (batch, input_size), jnp.float32)
    params = init_params(input_size, key)

    out = jax.block_until_ready(simple_linear_regression_nn(x, params))
    assert out.shape == (batch, 2)

    # Tight check vs a reference doing the same bf16-operand / f32-acc math.
    ref_bf16 = reference_forward(x, params, matmul_dtype=jnp.bfloat16)
    assert jnp.allclose(out, ref_bf16, atol=1e-4, rtol=1e-4)

    # Loose check vs the pure-f32 (PyTorch-equivalent) forward.
    ref_f32 = reference_forward(x, params, matmul_dtype=jnp.float32)
    assert jnp.allclose(out, ref_f32, atol=5e-2, rtol=5e-2)

    # Multi-tile grid with a masked (non-divisible) last block + two-stream path.
    xb = jax.random.normal(jax.random.PRNGKey(1), (600, input_size), jnp.float32)
    outb = jax.block_until_ready(
        simple_linear_regression_nn(xb, params, block_b=256))
    refb = reference_forward(xb, params, matmul_dtype=jnp.bfloat16)
    assert outb.shape == (600, 2)
    assert jnp.allclose(outb, refb, atol=1e-4, rtol=1e-4)

    # Default big tile (2048) with a mostly-masked second block.
    xc = jax.random.normal(jax.random.PRNGKey(2), (2050, input_size), jnp.float32)
    outc = jax.block_until_ready(simple_linear_regression_nn(xc, params))
    refc = reference_forward(xc, params, matmul_dtype=jnp.bfloat16)
    assert outc.shape == (2050, 2)
    assert jnp.allclose(outc, refc, atol=1e-4, rtol=1e-4)

    print("KERNEL_OK")
</pallas_src>

<mosaic_0001>
module attributes {stable_mosaic.version = 11 : i64} {
  func.func @mlp_kernel(%arg0: i32, %arg1: memref<8x32xf32, #tpu.memory_space<vmem>>, %arg2: memref<32x64xbf16, #tpu.memory_space<vmem>>, %arg3: memref<1x64xf32, #tpu.memory_space<vmem>>, %arg4: memref<64x32xbf16, #tpu.memory_space<vmem>>, %arg5: memref<1x32xf32, #tpu.memory_space<vmem>>, %arg6: memref<32x16xbf16, #tpu.memory_space<vmem>>, %arg7: memref<1x16xf32, #tpu.memory_space<vmem>>, %arg8: memref<16x8xbf16, #tpu.memory_space<vmem>>, %arg9: memref<1x8xf32, #tpu.memory_space<vmem>>, %arg10: memref<8x4xbf16, #tpu.memory_space<vmem>>, %arg11: memref<1x4xf32, #tpu.memory_space<vmem>>, %arg12: memref<4x2xbf16, #tpu.memory_space<vmem>>, %arg13: memref<1x2xf32, #tpu.memory_space<vmem>>, %arg14: memref<8x2xf32, #tpu.memory_space<vmem>>) attributes {dimension_semantics = [#tpu.dimension_semantics<parallel>], iteration_bounds = array<i64: 1>, scalar_prefetch = 0 : i64, scratch_operands = 0 : i64, tpu.core_type = #tpu.core_type<tc>, window_params = [{transform_indices = @transform_0, window_bounds = array<i64: 8, 32>}, {pipeline_mode = #tpu.pipeline_mode<synchronous>, transform_indices = @transform_1, window_bounds = array<i64: 32, 64>}, {pipeline_mode = #tpu.pipeline_mode<synchronous>, transform_indices = @transform_2, window_bounds = array<i64: 1, 64>}, {pipeline_mode = #tpu.pipeline_mode<synchronous>, transform_indices = @transform_3, window_bounds = array<i64: 64, 32>}, {pipeline_mode = #tpu.pipeline_mode<synchronous>, transform_indices = @transform_4, window_bounds = array<i64: 1, 32>}, {pipeline_mode = #tpu.pipeline_mode<synchronous>, transform_indices = @transform_5, window_bounds = array<i64: 32, 16>}, {pipeline_mode = #tpu.pipeline_mode<synchronous>, transform_indices = @transform_6, window_bounds = array<i64: 1, 16>}, {pipeline_mode = #tpu.pipeline_mode<synchronous>, transform_indices = @transform_7, window_bounds = array<i64: 16, 8>}, {pipeline_mode = #tpu.pipeline_mode<synchronous>, transform_indices = @transform_8, window_bounds = array<i64: 1, 8>}, {pipeline_mode = #tpu.pipeline_mode<synchronous>, transform_indices = @transform_9, window_bounds = array<i64: 8, 4>}, {pipeline_mode = #tpu.pipeline_mode<synchronous>, transform_indices = @transform_10, window_bounds = array<i64: 1, 4>}, {pipeline_mode = #tpu.pipeline_mode<synchronous>, transform_indices = @transform_11, window_bounds = array<i64: 4, 2>}, {pipeline_mode = #tpu.pipeline_mode<synchronous>, transform_indices = @transform_12, window_bounds = array<i64: 1, 2>}, {transform_indices = @transform_13, window_bounds = array<i64: 8, 2>}]} {
    %c0 = arith.constant 0 : index
    %c0_0 = arith.constant 0 : index
    %0 = vector.load %arg1[%c0, %c0_0] : memref<8x32xf32, #tpu.memory_space<vmem>>, vector<8x32xf32>
    %1 = arith.truncf %0 : vector<8x32xf32> to vector<8x32xbf16>
    %c0_1 = arith.constant 0 : index
    %c0_2 = arith.constant 0 : index
    %2 = vector.load %arg2[%c0_1, %c0_2] : memref<32x64xbf16, #tpu.memory_space<vmem>>, vector<32x64xbf16>
    %cst = arith.constant dense<0.000000e+00> : vector<8x64xf32>
    %3 = tpu.matmul %1, %2, %cst {dimension_numbers = #tpu.dot_dimension_numbers<[1], [0], [0], [1], [0, 0, 1, 1], [], []>} : vector<8x32xbf16>, vector<32x64xbf16>, vector<8x64xf32> -> vector<8x64xf32>
    %c0_3 = arith.constant 0 : index
    %c0_4 = arith.constant 0 : index
    %4 = vector.load %arg3[%c0_3, %c0_4] : memref<1x64xf32, #tpu.memory_space<vmem>>, vector<1x64xf32>
    %5 = vector.broadcast %4 : vector<1x64xf32> to vector<8x64xf32>
    %6 = arith.addf %3, %5 : vector<8x64xf32>
    %cst_5 = arith.constant 0.000000e+00 : f32
    %7 = vector.broadcast %cst_5 : f32 to vector<8x64xf32>
    %8 = arith.maximumf %6, %7 : vector<8x64xf32>
    %9 = arith.truncf %8 : vector<8x64xf32> to vector<8x64xbf16>
    %c0_6 = arith.constant 0 : index
    %c0_7 = arith.constant 0 : index
    %10 = vector.load %arg4[%c0_6, %c0_7] : memref<64x32xbf16, #tpu.memory_space<vmem>>, vector<64x32xbf16>
    %cst_8 = arith.constant dense<0.000000e+00> : vector<8x32xf32>
    %11 = tpu.matmul %9, %10, %cst_8 {dimension_numbers = #tpu.dot_dimension_numbers<[1], [0], [0], [1], [0, 0, 1, 1], [], []>} : vector<8x64xbf16>, vector<64x32xbf16>, vector<8x32xf32> -> vector<8x32xf32>
    %c0_9 = arith.constant 0 : index
    %c0_10 = arith.constant 0 : index
    %12 = vector.load %arg5[%c0_9, %c0_10] : memref<1x32xf32, #tpu.memory_space<vmem>>, vector<1x32xf32>
    %13 = vector.broadcast %12 : vector<1x32xf32> to vector<8x32xf32>
    %14 = arith.addf %11, %13 : vector<8x32xf32>
    %cst_11 = arith.constant 0.000000e+00 : f32
    %15 = vector.broadcast %cst_11 : f32 to vector<8x32xf32>
    %16 = arith.maximumf %14, %15 : vector<8x32xf32>
    %17 = arith.truncf %16 : vector<8x32xf32> to vector<8x32xbf16>
    %c0_12 = arith.constant 0 : index
    %c0_13 = arith.constant 0 : index
    %18 = vector.load %arg6[%c0_12, %c0_13] : memref<32x16xbf16, #tpu.memory_space<vmem>>, vector<32x16xbf16>
    %cst_14 = arith.constant dense<0.000000e+00> : vector<8x16xf32>
    %19 = tpu.matmul %17, %18, %cst_14 {dimension_numbers = #tpu.dot_dimension_numbers<[1], [0], [0], [1], [0, 0, 1, 1], [], []>} : vector<8x32xbf16>, vector<32x16xbf16>, vector<8x16xf32> -> vector<8x16xf32>
    %c0_15 = arith.constant 0 : index
    %c0_16 = arith.constant 0 : index
    %20 = vector.load %arg7[%c0_15, %c0_16] : memref<1x16xf32, #tpu.memory_space<vmem>>, vector<1x16xf32>
    %21 = vector.broadcast %20 : vector<1x16xf32> to vector<8x16xf32>
    %22 = arith.addf %19, %21 : vector<8x16xf32>
    %cst_17 = arith.constant 0.000000e+00 : f32
    %23 = vector.broadcast %cst_17 : f32 to vector<8x16xf32>
    %24 = arith.maximumf %22, %23 : vector<8x16xf32>
    %25 = arith.truncf %24 : vector<8x16xf32> to vector<8x16xbf16>
    %c0_18 = arith.constant 0 : index
    %c0_19 = arith.constant 0 : index
    %26 = vector.load %arg8[%c0_18, %c0_19] : memref<16x8xbf16, #tpu.memory_space<vmem>>, vector<16x8xbf16>
    %cst_20 = arith.constant dense<0.000000e+00> : vector<8x8xf32>
    %27 = tpu.matmul %25, %26, %cst_20 {dimension_numbers = #tpu.dot_dimension_numbers<[1], [0], [0], [1], [0, 0, 1, 1], [], []>} : vector<8x16xbf16>, vector<16x8xbf16>, vector<8x8xf32> -> vector<8x8xf32>
    %c0_21 = arith.constant 0 : index
    %c0_22 = arith.constant 0 : index
    %28 = vector.load %arg9[%c0_21, %c0_22] : memref<1x8xf32, #tpu.memory_space<vmem>>, vector<1x8xf32>
    %29 = vector.broadcast %28 : vector<1x8xf32> to vector<8x8xf32>
    %30 = arith.addf %27, %29 : vector<8x8xf32>
    %cst_23 = arith.constant 0.000000e+00 : f32
    %31 = vector.broadcast %cst_23 : f32 to vector<8x8xf32>
    %32 = arith.maximumf %30, %31 : vector<8x8xf32>
    %33 = arith.truncf %32 : vector<8x8xf32> to vector<8x8xbf16>
    %c0_24 = arith.constant 0 : index
    %c0_25 = arith.constant 0 : index
    %34 = vector.load %arg10[%c0_24, %c0_25] : memref<8x4xbf16, #tpu.memory_space<vmem>>, vector<8x4xbf16>
    %cst_26 = arith.constant dense<0.000000e+00> : vector<8x4xf32>
    %35 = tpu.matmul %33, %34, %cst_26 {dimension_numbers = #tpu.dot_dimension_numbers<[1], [0], [0], [1], [0, 0, 1, 1], [], []>} : vector<8x8xbf16>, vector<8x4xbf16>, vector<8x4xf32> -> vector<8x4xf32>
    %c0_27 = arith.constant 0 : index
    %c0_28 = arith.constant 0 : index
    %36 = vector.load %arg11[%c0_27, %c0_28] : memref<1x4xf32, #tpu.memory_space<vmem>>, vector<1x4xf32>
    %37 = vector.broadcast %36 : vector<1x4xf32> to vector<8x4xf32>
    %38 = arith.addf %35, %37 : vector<8x4xf32>
    %cst_29 = arith.constant 0.000000e+00 : f32
    %39 = vector.broadcast %cst_29 : f32 to vector<8x4xf32>
    %40 = arith.maximumf %38, %39 : vector<8x4xf32>
    %41 = arith.truncf %40 : vector<8x4xf32> to vector<8x4xbf16>
    %c0_30 = arith.constant 0 : index
    %c0_31 = arith.constant 0 : index
    %42 = vector.load %arg12[%c0_30, %c0_31] : memref<4x2xbf16, #tpu.memory_space<vmem>>, vector<4x2xbf16>
    %cst_32 = arith.constant dense<0.000000e+00> : vector<8x2xf32>
    %43 = tpu.matmul %41, %42, %cst_32 {dimension_numbers = #tpu.dot_dimension_numbers<[1], [0], [0], [1], [0, 0, 1, 1], [], []>} : vector<8x4xbf16>, vector<4x2xbf16>, vector<8x2xf32> -> vector<8x2xf32>
    %c0_33 = arith.constant 0 : index
    %c0_34 = arith.constant 0 : index
    %44 = vector.load %arg13[%c0_33, %c0_34] : memref<1x2xf32, #tpu.memory_space<vmem>>, vector<1x2xf32>
    %45 = vector.broadcast %44 : vector<1x2xf32> to vector<8x2xf32>
    %46 = arith.addf %43, %45 : vector<8x2xf32>
    %c0_35 = arith.constant 0 : index
    %c0_36 = arith.constant 0 : index
    %47 = vector.load %arg14[%c0_35, %c0_36] : memref<8x2xf32, #tpu.memory_space<vmem>>, vector<8x2xf32>
    tpu.vector_store %arg14[%c0_35, %c0_36], %46 {strides = array<i32>} : memref<8x2xf32, #tpu.memory_space<vmem>>, vector<8x2xf32>,
    return
  }
  func.func @transform_0(%arg0: i32) -> (i32, i32) {
    %c0_i32 = arith.constant 0 : i32
    %c0_i32_0 = arith.constant 0 : i32
    return %arg0, %c0_i32 : i32, i32
  }
  func.func @transform_1(%arg0: i32) -> (i32, i32) {
    %c0_i32 = arith.constant 0 : i32
    %c0_i32_0 = arith.constant 0 : i32
    %c0_i32_1 = arith.constant 0 : i32
    return %c0_i32, %c0_i32_0 : i32, i32
  }
  func.func @transform_2(%arg0: i32) -> (i32, i32) {
    %c0_i32 = arith.constant 0 : i32
    %c0_i32_0 = arith.constant 0 : i32
    %c0_i32_1 = arith.constant 0 : i32
    return %c0_i32, %c0_i32_0 : i32, i32
  }
  func.func @transform_3(%arg0: i32) -> (i32, i32) {
    %c0_i32 = arith.constant 0 : i32
    %c0_i32_0 = arith.constant 0 : i32
    %c0_i32_1 = arith.constant 0 : i32
    return %c0_i32, %c0_i32_0 : i32, i32
  }
  func.func @transform_4(%arg0: i32) -> (i32, i32) {
    %c0_i32 = arith.constant 0 : i32
    %c0_i32_0 = arith.constant 0 : i32
    %c0_i32_1 = arith.constant 0 : i32
    return %c0_i32, %c0_i32_0 : i32, i32
  }
  func.func @transform_5(%arg0: i32) -> (i32, i32) {
    %c0_i32 = arith.constant 0 : i32
    %c0_i32_0 = arith.constant 0 : i32
    %c0_i32_1 = arith.constant 0 : i32
    return %c0_i32, %c0_i32_0 : i32, i32
  }
  func.func @transform_6(%arg0: i32) -> (i32, i32) {
    %c0_i32 = arith.constant 0 : i32
    %c0_i32_0 = arith.constant 0 : i32
    %c0_i32_1 = arith.constant 0 : i32
    return %c0_i32, %c0_i32_0 : i32, i32
  }
  func.func @transform_7(%arg0: i32) -> (i32, i32) {
    %c0_i32 = arith.constant 0 : i32
    %c0_i32_0 = arith.constant 0 : i32
    %c0_i32_1 = arith.constant 0 : i32
    return %c0_i32, %c0_i32_0 : i32, i32
  }
  func.func @transform_8(%arg0: i32) -> (i32, i32) {
    %c0_i32 = arith.constant 0 : i32
    %c0_i32_0 = arith.constant 0 : i32
    %c0_i32_1 = arith.constant 0 : i32
    return %c0_i32, %c0_i32_0 : i32, i32
  }
  func.func @transform_9(%arg0: i32) -> (i32, i32) {
    %c0_i32 = arith.constant 0 : i32
    %c0_i32_0 = arith.constant 0 : i32
    %c0_i32_1 = arith.constant 0 : i32
    return %c0_i32, %c0_i32_0 : i32, i32
  }
  func.func @transform_10(%arg0: i32) -> (i32, i32) {
    %c0_i32 = arith.constant 0 : i32
    %c0_i32_0 = arith.constant 0 : i32
    %c0_i32_1 = arith.constant 0 : i32
    return %c0_i32, %c0_i32_0 : i32, i32
  }
  func.func @transform_11(%arg0: i32) -> (i32, i32) {
    %c0_i32 = arith.constant 0 : i32
    %c0_i32_0 = arith.constant 0 : i32
    %c0_i32_1 = arith.constant 0 : i32
    return %c0_i32, %c0_i32_0 : i32, i32
  }
  func.func @transform_12(%arg0: i32) -> (i32, i32) {
    %c0_i32 = arith.constant 0 : i32
    %c0_i32_0 = arith.constant 0 : i32
    %c0_i32_1 = arith.constant 0 : i32
    return %c0_i32, %c0_i32_0 : i32, i32
  }
  func.func @transform_13(%arg0: i32) -> (i32, i32) {
    %c0_i32 = arith.constant 0 : i32
    %c0_i32_0 = arith.constant 0 : i32
    return %arg0, %c0_i32 : i32, i32
  }
}

</mosaic_0001>

<llo_original>
// kernel: simple_linear_regression_nn.1
$region0: #{simple_linear_regression_nn.1}
  #allocation0 [shape = 'u32[]', space=smem, size = 0x4, offset = 0x4, fixed_abs, tag = 'smem constant byte address 0x4 - core index']
  #allocation1 [shape = 'u32[144,128]{1,0:T(1,128)}', space=vmem, size = 0x12000, scoped, tag = 'internal scratch']
  %s0 = inlined_call_operand.vmem [shape: f32[8,32], index: 0, kind: input, shape index: {}]
  %s1 = inlined_call_operand.vmem [shape: bf16[32,64], index: 1, kind: input, shape index: {}]
  %s2 = inlined_call_operand.vmem [shape: f32[1,64], index: 2, kind: input, shape index: {}]
  %s3 = inlined_call_operand.vmem [shape: bf16[64,32], index: 3, kind: input, shape index: {}]
  %s4 = inlined_call_operand.vmem [shape: f32[1,32], index: 4, kind: input, shape index: {}]
  %s5 = inlined_call_operand.vmem [shape: bf16[32,16], index: 5, kind: input, shape index: {}]
  %s6 = inlined_call_operand.vmem [shape: f32[1,16], index: 6, kind: input, shape index: {}]
  %s7 = inlined_call_operand.vmem [shape: bf16[16,8], index: 7, kind: input, shape index: {}]
  %s8 = inlined_call_operand.vmem [shape: f32[1,8], index: 8, kind: input, shape index: {}]
  %s9 = inlined_call_operand.vmem [shape: bf16[8,4], index: 9, kind: input, shape index: {}]
  %s10 = inlined_call_operand.vmem [shape: f32[1,4], index: 10, kind: input, shape index: {}]
  %s11 = inlined_call_operand.vmem [shape: bf16[4,2], index: 11, kind: input, shape index: {}]
  %s12 = inlined_call_operand.vmem [shape: f32[1,2], index: 12, kind: input, shape index: {}]
  %s13 = inlined_call_operand.vmem [shape: f32[8,2], index: 13, kind: output, shape index: {}]
  %s14 = sld [smem:[#allocation0]]
  $region62: #{simple_linear_regression_nn.1} parent=0
    _
  %s16 = ssub.s32 1, %s14
  %s17 = scalar_select 0, %s16, %s14
  // Predicated region
  $region2: #{simple_linear_regression_nn.1} parent=0 // pred_check
    _
  $region3: #{simple_linear_regression_nn.1} parent=0 // pred_check_branch
    %19 = sbr.rel (0) target = $region5
  $region4: #{simple_linear_regression_nn.1} parent=0 // pred_region
    _
  $region5: #{simple_linear_regression_nn.1} parent=0 // pred_fallthru
    _
  // Predicated region
  $region6: #{simple_linear_regression_nn.1} parent=0 // pred_check
    _
  $region7: #{simple_linear_regression_nn.1} parent=0 // pred_check_branch
    %21 = sbr.rel (0) target = $region9
  $region8: #{simple_linear_regression_nn.1} parent=0 // pred_region
    _
  $region9: #{simple_linear_regression_nn.1} parent=0 // pred_fallthru
    _
  // Predicated region
  $region10: #{simple_linear_regression_nn.1} parent=0 // pred_check
    _
  $region11: #{simple_linear_regression_nn.1} parent=0 // pred_check_branch
    %23 = sbr.rel (0) target = $region13
  $region12: #{simple_linear_regression_nn.1} parent=0 // pred_region
    _
  $region13: #{simple_linear_regression_nn.1} parent=0 // pred_fallthru
    _
  // Predicated region
  $region14: #{simple_linear_regression_nn.1} parent=0 // pred_check
    _
  $region15: #{simple_linear_regression_nn.1} parent=0 // pred_check_branch
    %25 = sbr.rel (0) target = $region17
  $region16: #{simple_linear_regression_nn.1} parent=0 // pred_region
    _
  $region17: #{simple_linear_regression_nn.1} parent=0 // pred_fallthru
    _
  // Predicated region
  $region18: #{simple_linear_regression_nn.1} parent=0 // pred_check
    _
  $region19: #{simple_linear_regression_nn.1} parent=0 // pred_check_branch
    %27 = sbr.rel (0) target = $region21
  $region20: #{simple_linear_regression_nn.1} parent=0 // pred_region
    _
  $region21: #{simple_linear_regression_nn.1} parent=0 // pred_fallthru
    _
  // Predicated region
  $region22: #{simple_linear_regression_nn.1} parent=0 // pred_check
    _
  $region23: #{simple_linear_regression_nn.1} parent=0 // pred_check_branch
    %29 = sbr.rel (0) target = $region25
  $region24: #{simple_linear_regression_nn.1} parent=0 // pred_region
    _
  $region25: #{simple_linear_regression_nn.1} parent=0 // pred_fallthru
    _
  // Predicated region
  $region26: #{simple_linear_regression_nn.1} parent=0 // pred_check
    _
  $region27: #{simple_linear_regression_nn.1} parent=0 // pred_check_branch
    %31 = sbr.rel (0) target = $region29
  $region28: #{simple_linear_regression_nn.1} parent=0 // pred_region
    _
  $region29: #{simple_linear_regression_nn.1} parent=0 // pred_fallthru
    _
  // Predicated region
  $region30: #{simple_linear_regression_nn.1} parent=0 // pred_check
    _
  $region31: #{simple_linear_regression_nn.1} parent=0 // pred_check_branch
    %33 = sbr.rel (0) target = $region33
  $region32: #{simple_linear_regression_nn.1} parent=0 // pred_region
    _
  $region33: #{simple_linear_regression_nn.1} parent=0 // pred_fallthru
    _
  // Predicated region
  $region34: #{simple_linear_regression_nn.1} parent=0 // pred_check
    _
  $region35: #{simple_linear_regression_nn.1} parent=0 // pred_check_branch
    %35 = sbr.rel (0) target = $region37
  $region36: #{simple_linear_regression_nn.1} parent=0 // pred_region
    _
  $region37: #{simple_linear_regression_nn.1} parent=0 // pred_fallthru
    _
  // Predicated region
  $region38: #{simple_linear_regression_nn.1} parent=0 // pred_check
    _
  $region39: #{simple_linear_regression_nn.1} parent=0 // pred_check_branch
    %37 = sbr.rel (0) target = $region41
  $region40: #{simple_linear_regression_nn.1} parent=0 // pred_region
    _
  $region41: #{simple_linear_regression_nn.1} parent=0 // pred_fallthru
    _
  // Predicated region
  $region42: #{simple_linear_regression_nn.1} parent=0 // pred_check
    _
  $region43: #{simple_linear_regression_nn.1} parent=0 // pred_check_branch
    %39 = sbr.rel (0) target = $region45
  $region44: #{simple_linear_regression_nn.1} parent=0 // pred_region
    _
  $region45: #{simple_linear_regression_nn.1} parent=0 // pred_fallthru
    _
  // Predicated region
  $region46: #{simple_linear_regression_nn.1} parent=0 // pred_check
    _
  $region47: #{simple_linear_regression_nn.1} parent=0 // pred_check_branch
    %41 = sbr.rel (0) target = $region49
  $region48: #{simple_linear_regression_nn.1} parent=0 // pred_region
    _
  $region49: #{simple_linear_regression_nn.1} parent=0 // pred_fallthru
    _
  // Predicated region
  $region50: #{simple_linear_regression_nn.1} parent=0 // pred_check
    _
  $region51: #{simple_linear_regression_nn.1} parent=0 // pred_check_branch
    %43 = sbr.rel (0) target = $region53
  $region52: #{simple_linear_regression_nn.1} parent=0 // pred_region
    _
  $region53: #{simple_linear_regression_nn.1} parent=0 // pred_fallthru
    _
  %v45 = vld [vmem:[%s0] sm:$0xff]
  %v46 = vpack.c.bf16 %v45, %v45
  %v47 = vld [vmem:[%s1] sm:$0xf]
  %v48 = vld [vmem:[%s1 + $0x4] sm:$0xf]
  %v49 = vld [vmem:[%s1 + $0x8] sm:$0xf]
  %v50 = vld [vmem:[%s1 + $0xc] sm:$0xf]
  %v51 = vld [vmem:[%s2] sm:$0x1]
  %v53 = vlaneseq
  %v54 = vshrl.u32 %v53, 7
  %v55 = vsub.s32 0, %v54
  %v56 = vrot.slane %v51, %v55
  %v62 = vunpack.c.l.b16 %v47
  %v63 = vunpack.c.l.b16 %v48
  %v64 = vunpack.c.l.b16 %v49
  %v65 = vunpack.c.l.b16 %v50
  %v66 = vpack.c.b16 %v63, %v62
  %v67 = vpack.c.b16 %v65, %v64
  %vm70 = vcmask 261120
  %v72 = vsel %vm70, %v46, 0
  %74 = vmatprep.subr.bf16.mxu0 0
  %75 = vmatpush1.bf16.msra.mxu0 %v66
  %76 = vmatprep.subr.bf16.mxu0 0
  %77 = vmatpush1.bf16.msra.mxu0 %v67
  %78 = vmatprep.subr.bf16.mxu0 0
  %79 = vmatpush1.bf16.msra.mxu0 0
  %80 = vmatprep.subr.bf16.mxu0 0
  %81 = vmatpush1.bf16.msra.mxu0 0
  %82 = vmatprep.subr.bf16.mxu0 0
  %83 = vmatpush1.bf16.msra.mxu0 0
  %84 = vmatprep.subr.bf16.mxu0 0
  %85 = vmatpush1.bf16.msra.mxu0 0
  %86 = vmatprep.subr.bf16.mxu0 0
  %87 = vmatpush1.bf16.msra.mxu0 0
  %88 = vmatprep.subr.bf16.mxu0 0
  %89 = vmatpush1.bf16.msra.mxu0 0
  %90 = vmatprep.subr.bf16.mxu0 0
  %91 = vmatpush1.bf16.msra.mxu0 0
  %92 = vmatprep.subr.bf16.mxu0 0
  %93 = vmatpush1.bf16.msra.mxu0 0
  %94 = vmatprep.subr.bf16.mxu0 0
  %95 = vmatpush1.bf16.msra.mxu0 0
  %96 = vmatprep.subr.bf16.mxu0 0
  %97 = vmatpush1.bf16.msra.mxu0 0
  %98 = vmatprep.subr.bf16.mxu0 0
  %99 = vmatpush1.bf16.msra.mxu0 0
  %100 = vmatprep.subr.bf16.mxu0 0
  %101 = vmatpush1.bf16.msra.mxu0 0
  %102 = vmatprep.subr.bf16.mxu0 0
  %103 = vmatpush1.bf16.msra.mxu0 0
  %104 = vmatprep.subr.bf16.mxu0 0
  %105 = vmatpush1.bf16.msra.mxu0 0
  %106 = vmatprep.mubr.bf16.mxu0 0
  %107 = vmatmul.mubr.bf16.gmra.mrb[0].mxu0 %v72
  %v108 = vpop.f32.mrb[0].mxu0
  %v109 = vadd.f32 %v56, %v108
  %v110 = vpop.f32.mrb[0].mxu0
  %v111 = vpop.f32.mrb[0].mxu0
  %v112 = vpop.f32.mrb[0].mxu0
  %113 = vdwg.mxu0
  %v114 = vmax.f32 %v109, 0.0
  %v115 = vpack.c.bf16 %v114, %v114
  %v116 = vld [vmem:[%s3] sm:$0xf]
  %v117 = vld [vmem:[%s3 + $0x4] sm:$0xf]
  %v118 = vld [vmem:[%s3 + $0x8] sm:$0xf]
  %v119 = vld [vmem:[%s3 + $0xc] sm:$0xf]
  %v120 = vld [vmem:[%s3 + $0x10] sm:$0xf]
  %v121 = vld [vmem:[%s3 + $0x14] sm:$0xf]
  %v122 = vld [vmem:[%s3 + $0x18] sm:$0xf]
  %v123 = vld [vmem:[%s3 + $0x1c] sm:$0xf]
  %v124 = vld [vmem:[%s4] sm:$0x1]
  %v126 = vlaneseq
  %v127 = vshrl.u32 %v126, 7
  %v128 = vsub.s32 0, %v127
  %v129 = vrot.slane %v124, %v128
  %v139 = vunpack.c.l.b16 %v116
  %v140 = vunpack.c.l.b16 %v117
  %v141 = vunpack.c.l.b16 %v118
  %v142 = vunpack.c.l.b16 %v119
  %v143 = vunpack.c.l.b16 %v120
  %v144 = vunpack.c.l.b16 %v121
  %v145 = vunpack.c.l.b16 %v122
  %v146 = vunpack.c.l.b16 %v123
  %v147 = vpack.c.b16 %v140, %v139
  %v148 = vpack.c.b16 %v142, %v141
  %v149 = vpack.c.b16 %v144, %v143
  %v150 = vpack.c.b16 %v146, %v145
  %vm155 = vcmask 523264
  %v157 = vsel %vm155, %v115, 0
  %159 = vmatprep.subr.bf16.mxu0 0
  %160 = vmatpush1.bf16.msra.mxu0 %v147
  %161 = vmatprep.subr.bf16.mxu0 0
  %162 = vmatpush1.bf16.msra.mxu0 %v148
  %163 = vmatprep.subr.bf16.mxu0 0
  %164 = vmatpush1.bf16.msra.mxu0 %v149
  %165 = vmatprep.subr.bf16.mxu0 0
  %166 = vmatpush1.bf16.msra.mxu0 %v150
  %167 = vmatprep.subr.bf16.mxu0 0
  %168 = vmatpush1.bf16.msra.mxu0 0
  %169 = vmatprep.subr.bf16.mxu0 0
  %170 = vmatpush1.bf16.msra.mxu0 0
  %171 = vmatprep.subr.bf16.mxu0 0
  %172 = vmatpush1.bf16.msra.mxu0 0
  %173 = vmatprep.subr.bf16.mxu0 0
  %174 = vmatpush1.bf16.msra.mxu0 0
  %175 = vmatprep.subr.bf16.mxu0 0
  %176 = vmatpush1.bf16.msra.mxu0 0
  %177 = vmatprep.subr.bf16.mxu0 0
  %178 = vmatpush1.bf16.msra.mxu0 0
  %179 = vmatprep.subr.bf16.mxu0 0
  %180 = vmatpush1.bf16.msra.mxu0 0
  %181 = vmatprep.subr.bf16.mxu0 0
  %182 = vmatpush1.bf16.msra.mxu0 0
  %183 = vmatprep.subr.bf16.mxu0 0
  %184 = vmatpush1.bf16.msra.mxu0 0
  %185 = vmatprep.subr.bf16.mxu0 0
  %186 = vmatpush1.bf16.msra.mxu0 0
  %187 = vmatprep.subr.bf16.mxu0 0
  %188 = vmatpush1.bf16.msra.mxu0 0
  %189 = vmatprep.subr.bf16.mxu0 0
  %190 = vmatpush1.bf16.msra.mxu0 0
  %191 = vmatprep.mubr.bf16.mxu0 0
  %192 = vmatmul.mubr.bf16.gmra.mrb[0].mxu0 %v157
  %v193 = vpop.f32.mrb[0].mxu0
  %v194 = vadd.f32 %v129, %v193
  %v195 = vpop.f32.mrb[0].mxu0
  %v196 = vpop.f32.mrb[0].mxu0
  %v197 = vpop.f32.mrb[0].mxu0
  %198 = vdwg.mxu0
  %v199 = vmax.f32 %v194, 0.0
  %v200 = vpack.c.bf16 %v199, %v199
  %v201 = vld [vmem:[%s5] sm:$0xf]
  %v202 = vld [vmem:[%s5 + $0x4] sm:$0xf]
  %v203 = vld [vmem:[%s5 + $0x8] sm:$0xf]
  %v204 = vld [vmem:[%s5 + $0xc] sm:$0xf]
  %v205 = vld [vmem:[%s6] sm:$0x1]
  %v207 = vlaneseq
  %v208 = vshrl.u32 %v207, 7
  %v209 = vsub.s32 0, %v208
  %v210 = vrot.slane %v205, %v209
  %v216 = vunpack.c.l.b16 %v201
  %v217 = vunpack.c.l.b16 %v202
  %v218 = vunpack.c.l.b16 %v203
  %v219 = vunpack.c.l.b16 %v204
  %v220 = vpack.c.b16 %v217, %v216
  %v221 = vpack.c.b16 %v219, %v218
  %v225 = vsel %vm70, %v200, 0
  %227 = vmatprep.subr.bf16.mxu0 0
  %228 = vmatpush1.bf16.msra.mxu0 %v220
  %229 = vmatprep.subr.bf16.mxu0 0
  %230 = vmatpush1.bf16.msra.mxu0 %v221
  %231 = vmatprep.subr.bf16.mxu0 0
  %232 = vmatpush1.bf16.msra.mxu0 0
  %233 = vmatprep.subr.bf16.mxu0 0
  %234 = vmatpush1.bf16.msra.mxu0 0
  %235 = vmatprep.subr.bf16.mxu0 0
  %236 = vmatpush1.bf16.msra.mxu0 0
  %237 = vmatprep.subr.bf16.mxu0 0
  %238 = vmatpush1.bf16.msra.mxu0 0
  %239 = vmatprep.subr.bf16.mxu0 0
  %240 = vmatpush1.bf16.msra.mxu0 0
  %241 = vmatprep.subr.bf16.mxu0 0
  %242 = vmatpush1.bf16.msra.mxu0 0
  %243 = vmatprep.subr.bf16.mxu0 0
  %244 = vmatpush1.bf16.msra.mxu0 0
  %245 = vmatprep.subr.bf16.mxu0 0
  %246 = vmatpush1.bf16.msra.mxu0 0
  %247 = vmatprep.subr.bf16.mxu0 0
  %248 = vmatpush1.bf16.msra.mxu0 0
  %249 = vmatprep.subr.bf16.mxu0 0
  %250 = vmatpush1.bf16.msra.mxu0 0
  %251 = vmatprep.subr.bf16.mxu0 0
  %252 = vmatpush1.bf16.msra.mxu0 0
  %253 = vmatprep.subr.bf16.mxu0 0
  %254 = vmatpush1.bf16.msra.mxu0 0
  %255 = vmatprep.subr.bf16.mxu0 0
  %256 = vmatpush1.bf16.msra.mxu0 0
  %257 = vmatprep.subr.bf16.mxu0 0
  %258 = vmatpush1.bf16.msra.mxu0 0
  %259 = vmatprep.mubr.bf16.mxu0 0
  %260 = vmatmul.mubr.bf16.gmra.mrb[0].mxu0 %v225
  %v261 = vpop.f32.mrb[0].mxu0
  %v262 = vadd.f32 %v210, %v261
  %v263 = vpop.f32.mrb[0].mxu0
  %v264 = vpop.f32.mrb[0].mxu0
  %v265 = vpop.f32.mrb[0].mxu0
  %266 = vdwg.mxu0
  %v267 = vmax.f32 %v262, 0.0
  %v268 = vpack.c.bf16 %v267, %v267
  %v269 = vld [vmem:[%s7] sm:$0xf]
  %v270 = vld [vmem:[%s7 + $0x4] sm:$0xf]
  %v271 = vld [vmem:[%s8] sm:$0x1]
  %v273 = vlaneseq
  %v274 = vshrl.u32 %v273, 7
  %v275 = vsub.s32 0, %v274
  %v276 = vrot.slane %v271, %v275
  %v280 = vunpack.c.l.b16 %v269
  %v281 = vunpack.c.l.b16 %v270
  %v282 = vpack.c.b16 %v281, %v280
  %vm284 = vcmask 130048
  %v286 = vsel %vm284, %v268, 0
  %288 = vmatprep.subr.bf16.mxu0 0
  %289 = vmatpush1.bf16.msra.mxu0 %v282
  %290 = vmatprep.subr.bf16.mxu0 0
  %291 = vmatpush1.bf16.msra.mxu0 0
  %292 = vmatprep.subr.bf16.mxu0 0
  %293 = vmatpush1.bf16.msra.mxu0 0
  %294 = vmatprep.subr.bf16.mxu0 0
  %295 = vmatpush1.bf16.msra.mxu0 0
  %296 = vmatprep.subr.bf16.mxu0 0
  %297 = vmatpush1.bf16.msra.mxu0 0
  %298 = vmatprep.subr.bf16.mxu0 0
  %299 = vmatpush1.bf16.msra.mxu0 0
  %300 = vmatprep.subr.bf16.mxu0 0
  %301 = vmatpush1.bf16.msra.mxu0 0
  %302 = vmatprep.subr.bf16.mxu0 0
  %303 = vmatpush1.bf16.msra.mxu0 0
  %304 = vmatprep.subr.bf16.mxu0 0
  %305 = vmatpush1.bf16.msra.mxu0 0
  %306 = vmatprep.subr.bf16.mxu0 0
  %307 = vmatpush1.bf16.msra.mxu0 0
  %308 = vmatprep.subr.bf16.mxu0 0
  %309 = vmatpush1.bf16.msra.mxu0 0
  %310 = vmatprep.subr.bf16.mxu0 0
  %311 = vmatpush1.bf16.msra.mxu0 0
  %312 = vmatprep.subr.bf16.mxu0 0
  %313 = vmatpush1.bf16.msra.mxu0 0
  %314 = vmatprep.subr.bf16.mxu0 0
  %315 = vmatpush1.bf16.msra.mxu0 0
  %316 = vmatprep.subr.bf16.mxu0 0
  %317 = vmatpush1.bf16.msra.mxu0 0
  %318 = vmatprep.subr.bf16.mxu0 0
  %319 = vmatpush1.bf16.msra.mxu0 0
  %320 = vmatprep.mubr.bf16.mxu0 0
  %321 = vmatmul.mubr.bf16.gmra.mrb[0].mxu0 %v286
  %v322 = vpop.f32.mrb[0].mxu0
  %v323 = vadd.f32 %v276, %v322
  %v324 = vpop.f32.mrb[0].mxu0
  %v325 = vpop.f32.mrb[0].mxu0
  %v326 = vpop.f32.mrb[0].mxu0
  %327 = vdwg.mxu0
  %v328 = vmax.f32 %v323, 0.0
  %v329 = vpack.c.bf16 %v328, %v328
  %v330 = vld [vmem:[%s9] sm:$0xf]
  %v331 = vld [vmem:[%s10] sm:$0x1]
  %v333 = vlaneseq
  %v334 = vshrl.u32 %v333, 7
  %v335 = vsub.s32 0, %v334
  %v336 = vrot.slane %v331, %v335
  %vm338 = vcmask 64512
  %v340 = vsel %vm338, %v329, 0
  %vm342 = vcmask 1043456
  %v344 = vsel %vm342, %v330, 0
  %346 = vmatprep.subr.bf16.mxu0 0
  %347 = vmatpush1.bf16.msra.mxu0 %v344
  %348 = vmatprep.subr.bf16.mxu0 0
  %349 = vmatpush1.bf16.msra.mxu0 0
  %350 = vmatprep.subr.bf16.mxu0 0
  %351 = vmatpush1.bf16.msra.mxu0 0
  %352 = vmatprep.subr.bf16.mxu0 0
  %353 = vmatpush1.bf16.msra.mxu0 0
  %354 = vmatprep.subr.bf16.mxu0 0
  %355 = vmatpush1.bf16.msra.mxu0 0
  %356 = vmatprep.subr.bf16.mxu0 0
  %357 = vmatpush1.bf16.msra.mxu0 0
  %358 = vmatprep.subr.bf16.mxu0 0
  %359 = vmatpush1.bf16.msra.mxu0 0
  %360 = vmatprep.subr.bf16.mxu0 0
  %361 = vmatpush1.bf16.msra.mxu0 0
  %362 = vmatprep.subr.bf16.mxu0 0
  %363 = vmatpush1.bf16.msra.mxu0 0
  %364 = vmatprep.subr.bf16.mxu0 0
  %365 = vmatpush1.bf16.msra.mxu0 0
  %366 = vmatprep.subr.bf16.mxu0 0
  %367 = vmatpush1.bf16.msra.mxu0 0
  %368 = vmatprep.subr.bf16.mxu0 0
  %369 = vmatpush1.bf16.msra.mxu0 0
  %370 = vmatprep.subr.bf16.mxu0 0
  %371 = vmatpush1.bf16.msra.mxu0 0
  %372 = vmatprep.subr.bf16.mxu0 0
  %373 = vmatpush1.bf16.msra.mxu0 0
  %374 = vmatprep.subr.bf16.mxu0 0
  %375 = vmatpush1.bf16.msra.mxu0 0
  %376 = vmatprep.subr.bf16.mxu0 0
  %377 = vmatpush1.bf16.msra.mxu0 0
  %378 = vmatprep.mubr.bf16.mxu0 0
  %379 = vmatmul.mubr.bf16.gmra.mrb[0].mxu0 %v340
  %v380 = vpop.f32.mrb[0].mxu0
  %v381 = vadd.f32 %v336, %v380
  %v382 = vpop.f32.mrb[0].mxu0
  %v383 = vpop.f32.mrb[0].mxu0
  %v384 = vpop.f32.mrb[0].mxu0
  %385 = vdwg.mxu0
  %v386 = vmax.f32 %v381, 0.0
  %v387 = vpack.c.bf16 %v386, %v386
  %v388 = vld [vmem:[%s11] sm:$0x3]
  %v389 = vld [vmem:[%s12] sm:$0x1]
  %v391 = vlaneseq
  %v392 = vshrl.u32 %v391, 7
  %v393 = vsub.s32 0, %v392
  %v394 = vrot.slane %v389, %v393
  %vm396 = vcmask 31744
  %v398 = vsel %vm396, %v387, 0
  %vm400 = vcmask 1041408
  %v402 = vsel %vm400, %v388, 0
  %404 = vmatprep.subr.bf16.mxu0 0
  %405 = vmatpush1.bf16.msra.mxu0 %v402
  %406 = vmatprep.subr.bf16.mxu0 0
  %407 = vmatpush1.bf16.msra.mxu0 0
  %408 = vmatprep.subr.bf16.mxu0 0
  %409 = vmatpush1.bf16.msra.mxu0 0
  %410 = vmatprep.subr.bf16.mxu0 0
  %411 = vmatpush1.bf16.msra.mxu0 0
  %412 = vmatprep.subr.bf16.mxu0 0
  %413 = vmatpush1.bf16.msra.mxu0 0
  %414 = vmatprep.subr.bf16.mxu0 0
  %415 = vmatpush1.bf16.msra.mxu0 0
  %416 = vmatprep.subr.bf16.mxu0 0
  %417 = vmatpush1.bf16.msra.mxu0 0
  %418 = vmatprep.subr.bf16.mxu0 0
  %419 = vmatpush1.bf16.msra.mxu0 0
  %420 = vmatprep.subr.bf16.mxu0 0
  %421 = vmatpush1.bf16.msra.mxu0 0
  %422 = vmatprep.subr.bf16.mxu0 0
  %423 = vmatpush1.bf16.msra.mxu0 0
  %424 = vmatprep.subr.bf16.mxu0 0
  %425 = vmatpush1.bf16.msra.mxu0 0
  %426 = vmatprep.subr.bf16.mxu0 0
  %427 = vmatpush1.bf16.msra.mxu0 0
  %428 = vmatprep.subr.bf16.mxu0 0
  %429 = vmatpush1.bf16.msra.mxu0 0
  %430 = vmatprep.subr.bf16.mxu0 0
  %431 = vmatpush1.bf16.msra.mxu0 0
  %432 = vmatprep.subr.bf16.mxu0 0
  %433 = vmatpush1.bf16.msra.mxu0 0
  %434 = vmatprep.subr.bf16.mxu0 0
  %435 = vmatpush1.bf16.msra.mxu0 0
  %436 = vmatprep.mubr.bf16.mxu0 0
  %437 = vmatmul.mubr.bf16.gmra.mrb[0].mxu0 %v398
  %v438 = vpop.f32.mrb[0].mxu0
  %v439 = vadd.f32 %v394, %v438
  %v440 = vpop.f32.mrb[0].mxu0
  %v441 = vpop.f32.mrb[0].mxu0
  %v442 = vpop.f32.mrb[0].mxu0
  %443 = vdwg.mxu0
  %vm444 = vcmask 15360
  %445 = vst.msk [vmem:[%s13] sm:$0xff] %vm444, %v439
  // Predicated region
  $region54: #{simple_linear_regression_nn.1} parent=0 // pred_check
    _
  $region55: #{simple_linear_regression_nn.1} parent=0 // pred_check_branch
    %447 = sbr.rel (0) target = $region57
  $region56: #{simple_linear_regression_nn.1} parent=0 // pred_region
    _
  $region57: #{simple_linear_regression_nn.1} parent=0 // pred_fallthru
    _
  // Predicated region
  $region58: #{simple_linear_regression_nn.1} parent=0 // pred_check
    _
  $region59: #{simple_linear_regression_nn.1} parent=0 // pred_check_branch
    %449 = sbr.rel (0) target = $region61
  $region60: #{simple_linear_regression_nn.1} parent=0 // pred_region
    _
  $region61: #{simple_linear_regression_nn.1} parent=0 // pred_fallthru
    _

</llo_original>
